<compile_context>
chip_gen: v6e
topology: v6e:2x2x1
jax: 0.10.0
libtpu: 0.0.40
codegen_flags: <defaults>
</compile_context>

<pallas_src>
import functools

import jax
import jax.numpy as jnp
from jax.experimental import pallas as pl
from jax.experimental.pallas import tpu as pltpu

_LANE = 128


def _cdiv(a, b):
    return (a + b - 1) // b


def _round_up(x, m):
    return ((x + m - 1) // m) * m


def _vmem_budget():
    """Generation-aware VMEM budgets (v5e/v6e: 128 MiB, v7x: 64 MiB physical)."""
    cap = 64 * 1024 * 1024                      # conservative fallback (v7x-sized)
    try:
        cap = int(pltpu.get_tpu_info().vmem_capacity_bytes)
    except Exception:
        pass
    tile_budget = int(cap * 0.60)               # what _pick_tm plans against
    vmem_limit = min(int(cap * 0.85), tile_budget + (16 << 20))
    return tile_budget, vmem_limit


def _pick_tm(num_tokens, hidden, num_experts, top_k, x_itemsize, w_itemsize, budget):
    """Largest token tile (multiple of 128) whose VMEM footprint fits `budget`.

    Footprint per grid step: double-buffered x tile + router weight (charged
    as two buffers, conservative even if Buffered(1) is honored) + both
    double-buffered lane-dense outputs + the live (tm, E) f32 intermediates
    (logits / transposed work / iota) that otherwise spill uncounted.
    """
    w_cost = 2 * hidden * num_experts * w_itemsize
    tm = _LANE
    for cand in (2048, 1024, 512, 256, 128):
        need = (2 * cand * hidden * x_itemsize          # x tile, double-buffered
                + w_cost                                # resident weight
                + 2 * 2 * top_k * cand * 4              # f32 + i32 outputs, double-buffered
                + 4 * cand * num_experts * 4)           # in-kernel (tm, E) intermediates
        if need <= budget:
            tm = cand
            break
    # Don't tile past the (lane-rounded) token count for small inputs.
    tm = max(_LANE, min(tm, _round_up(num_tokens, _LANE)))
    # Keep >= 2 grid steps when possible so both v7x TensorCores get work
    # (dimension_semantics=("parallel",)); harmless extra step on 1-TC chips.
    while tm > _LANE and _cdiv(num_tokens, tm) < 2:
        tm = _round_up(tm // 2, _LANE)
    return tm


def _router_kernel(x_ref, w_ref, vals_ref, idx_ref, *, top_k, compute_dtype):
    """Per-tile: MXU matmul -> logits, one transpose to token-lane-dense layout,
    iterative arg-max top-k along sublanes, unmasked lane-dense stores.

    x_ref:    (tm, H)      token tile, streamed in its native dtype
    w_ref:    (H,  E)      full router weight (resident: constant index_map)
    vals_ref: (top_k, tm)  top-k logit values, tokens on the lane axis (f32)
    idx_ref:  (top_k, tm)  top-k expert indices, tokens on the lane axis (i32)
    """
    x = x_ref[...]
    w = w_ref[...]
    if compute_dtype is not None:
        # Optional lower-precision MXU path; cast happens on-chip in VMEM,
        # not as a separate XLA pass over HBM.
        x = x.astype(compute_dtype)
        w = w.astype(compute_dtype)
    logits = jnp.dot(x, w, preferred_element_type=jnp.float32)      # (tm, E) f32

    # Single XLU relayout: tokens on the 128-lane axis. Every later reduction
    # is per-lane (over sublanes) and every store is unmasked lane-dense.
    work = logits.T                                                  # (E, tm)
    num_experts = work.shape[0]
    expert_iota = jax.lax.broadcasted_iota(jnp.int32, work.shape, 0)

    # Iterative arg-max top-k (top_k is tiny). Ties -> lowest expert index,
    # matching torch.topk / lax.top_k.
    # TODO(synk): NaN logits would pick an out-of-range index (torch.topk treats
    # NaN as largest); genuine -inf logits collide with the masking sentinel.
    vals, idxs = [], []
    for _ in range(top_k):
        m = jnp.max(work, axis=0, keepdims=True)                     # (1, tm)
        idx = jnp.min(jnp.where(work == m, expert_iota, num_experts),
                      axis=0, keepdims=True)                         # (1, tm)
        vals.append(m)
        idxs.append(idx)
        # Mask only the chosen slot so duplicate values can still win later.
        work = jnp.where(expert_iota == idx, -jnp.inf, work)

    vals_ref[...] = jnp.concatenate(vals, axis=0)                    # (top_k, tm)
    idx_ref[...] = jnp.concatenate(idxs, axis=0)


def _weight_spec(hidden, num_experts):
    index_map = lambda i: (0, 0)
    try:
        buffered = getattr(pl, "Buffered", None)
        if buffered is not None:
            # Constant index_map -> fetched once; a single buffer is enough.
            return pl.BlockSpec((hidden, num_experts), index_map,
                                pipeline_mode=buffered(1))
    except TypeError:
        pass
    return pl.BlockSpec((hidden, num_experts), index_map)


@functools.partial(jax.jit, static_argnames=("top_k", "tm", "compute_dtype"))
def top_n_router(hidden_states, weight, *, top_k=2, tm=None, compute_dtype=None):
    """Forward of TopNRouter.

    hidden_states: (..., H); weight: (E, H), torch nn.Linear layout.
    Returns (router_probs, topk_experts_index), both shaped (..., top_k).
    router_probs are the raw top-k logits (f32); aux/z losses are forward
    identities in the reference module and therefore omitted.

    compute_dtype=None (default) multiplies in the input dtype for parity with
    the torch module; pass jnp.bfloat16 for an on-chip lower-precision matmul.
    """
    *lead, H = hidden_states.shape
    E = weight.shape[0]
    T = 1
    for d in lead:
        T *= d

    # No wrapper-side dtype cast and no padding: either would add a full extra
    # HBM pass over the activations, which dominate this HBM-bound kernel.
    x = hidden_states.reshape(T, H)
    w_t = weight.T                                   # (H, E), tiny

    tile_budget, vmem_limit = _vmem_budget()
    if tm is None:
        tm = _pick_tm(T, H, E, top_k,
                      jnp.dtype(x.dtype).itemsize,
                      jnp.dtype(w_t.dtype).itemsize,
                      tile_budget)

    grid = (_cdiv(T, tm),)   # edge block handled by Pallas (masked partial store)

    vals_t, idx_t = pl.pallas_call(
        functools.partial(_router_kernel, top_k=top_k, compute_dtype=compute_dtype),
        out_shape=(
            jax.ShapeDtypeStruct((top_k, T), jnp.float32),
            jax.ShapeDtypeStruct((top_k, T), jnp.int32),
        ),
        grid_spec=pltpu.PrefetchScalarGridSpec(
            num_scalar_prefetch=0,
            grid=grid,
            in_specs=[
                pl.BlockSpec((tm, H), lambda i: (i, 0)),   # token tile
                _weight_spec(H, E),                        # weight: fetched once
            ],
            out_specs=(
                pl.BlockSpec((top_k, tm), lambda i: (0, i)),
                pl.BlockSpec((top_k, tm), lambda i: (0, i)),
            ),
        ),
        compiler_params=pltpu.CompilerParams(
            dimension_semantics=("parallel",),
            vmem_limit_bytes=vmem_limit,
        ),
    )(x, w_t)

    vals = vals_t.T.reshape(*lead, top_k)
    idxs = idx_t.T.reshape(*lead, top_k)
    return vals, idxs


if __name__ == "__main__":
    # Small config consistent with the module: hidden_size=32, num_experts=8, top_k=2.
    B, S, H, E, K = 2, 8, 32, 8, 2

    key = jax.random.PRNGKey(0)
    k_x, k_w, k_x2, k_w2 = jax.random.split(key, 4)
    hidden_states = jax.random.normal(k_x, (B, S, H), dtype=jnp.float32)
    # torch nn.Linear weight layout: (num_experts, hidden_size)
    classifier_w = jax.random.normal(k_w, (E, H), dtype=jnp.float32) * 0.02

    # 1) Default path: native f32 streaming, matches the torch module's Linear + topk.
    probs, idx = top_n_router(hidden_states, classifier_w, top_k=K)
    jax.block_until_ready((probs, idx))
    ref_logits = hidden_states.reshape(-1, H) @ classifier_w.T
    ref_vals, ref_idx = jax.lax.top_k(ref_logits, K)
    assert probs.shape == (B, S, K) and idx.shape == (B, S, K)
    assert jnp.allclose(probs.reshape(-1, K), ref_vals, atol=1e-4), "f32 values mismatch"
    assert jnp.array_equal(idx.reshape(-1, K), ref_idx.astype(jnp.int32)), "f32 indices mismatch"

    # 2) Multi-block grid with a partial edge block (T % tm != 0), no wrapper padding.
    B2, S2, H2, E2, K2 = 1, 300, 32, 16, 4
    x2 = jax.random.normal(k_x2, (B2, S2, H2), dtype=jnp.float32)
    w2 = jax.random.normal(k_w2, (E2, H2), dtype=jnp.float32) * 0.02
    probs2, idx2 = top_n_router(x2, w2, top_k=K2, tm=128)
    jax.block_until_ready((probs2, idx2))
    ref_logits2 = x2.reshape(-1, H2) @ w2.T
    ref_vals2, _ = jax.lax.top_k(ref_logits2, K2)
    assert probs2.shape == (B2, S2, K2) and idx2.shape == (B2, S2, K2)
    assert jnp.allclose(probs2.reshape(-1, K2), ref_vals2, atol=1e-3), "edge-block values mismatch"
    picked = jnp.take_along_axis(ref_logits2, idx2.reshape(-1, K2), axis=-1)
    assert jnp.allclose(picked, probs2.reshape(-1, K2), atol=1e-3), "edge-block indices inconsistent"
    assert bool(jnp.all((idx2 >= 0) & (idx2 < E2))), "edge-block index out of range"

    # 3) Optional on-chip bf16 compute path (perf config when bf16 matmul is acceptable).
    probs_bf, idx_bf = top_n_router(hidden_states, classifier_w, top_k=K,
                                    compute_dtype=jnp.bfloat16)
    jax.block_until_ready((probs_bf, idx_bf))
    ref_logits_bf = jnp.dot(hidden_states.reshape(-1, H).astype(jnp.bfloat16),
                            classifier_w.T.astype(jnp.bfloat16),
                            preferred_element_type=jnp.float32)
    ref_vals_bf, _ = jax.lax.top_k(ref_logits_bf, K)
    assert jnp.allclose(probs_bf.reshape(-1, K), ref_vals_bf, atol=1e-2), "bf16 values mismatch"

    print("KERNEL_OK")
</pallas_src>

<mosaic_0001>
module attributes {stable_mosaic.version = 11 : i64} {
  func.func @_router_kernel(%arg0: i32, %arg1: memref<128x32xf32, #tpu.memory_space<vmem>>, %arg2: memref<32x8xf32, #tpu.memory_space<vmem>>, %arg3: memref<2x128xf32, #tpu.memory_space<vmem>>, %arg4: memref<2x128xi32, #tpu.memory_space<vmem>>) attributes {dimension_semantics = [#tpu.dimension_semantics<parallel>], iteration_bounds = array<i64: 1>, scalar_prefetch = 0 : i64, scratch_operands = 0 : i64, tpu.core_type = #tpu.core_type<tc>, window_params = [{transform_indices = @transform_0, window_bounds = array<i64: 128, 32>}, {pipeline_mode = #tpu.pipeline_mode<synchronous>, transform_indices = @transform_1, window_bounds = array<i64: 32, 8>}, {transform_indices = @transform_2, window_bounds = array<i64: 2, 128>}, {transform_indices = @transform_3, window_bounds = array<i64: 2, 128>}]} {
    %c0 = arith.constant 0 : index
    %c0_0 = arith.constant 0 : index
    %0 = vector.load %arg1[%c0, %c0_0] : memref<128x32xf32, #tpu.memory_space<vmem>>, vector<128x32xf32>
    %c0_1 = arith.constant 0 : index
    %c0_2 = arith.constant 0 : index
    %1 = vector.load %arg2[%c0_1, %c0_2] : memref<32x8xf32, #tpu.memory_space<vmem>>, vector<32x8xf32>
    %cst = arith.constant dense<0.000000e+00> : vector<128x8xf32>
    %2 = tpu.matmul %0, %1, %cst {dimension_numbers = #tpu.dot_dimension_numbers<[1], [0], [0], [1], [0, 0, 1, 1], [], []>} : vector<128x32xf32>, vector<32x8xf32>, vector<128x8xf32> -> vector<128x8xf32>
    %3 = tpu.transpose %2, [1, 0] : vector<128x8xf32> -> vector<8x128xf32>
    %4 = tpu.iota {dimensions = array<i32: 0>} : vector<8x128xi32>
    %cst_3 = arith.constant dense<0xFF800000> : vector<128xf32>
    %5 = vector.multi_reduction <maximumf>, %3, %cst_3 [0] : vector<8x128xf32> to vector<128xf32>
    %6 = vector.shape_cast %5 : vector<128xf32> to vector<1x128xf32>
    %7 = vector.broadcast %6 : vector<1x128xf32> to vector<8x128xf32>
    %8 = arith.cmpf oeq, %3, %7 : vector<8x128xf32>
    %c8_i32 = arith.constant 8 : i32
    %9 = vector.broadcast %c8_i32 : i32 to vector<8x128xi32>
    %10 = arith.select %8, %4, %9 : vector<8x128xi1>, vector<8x128xi32>
    %cst_4 = arith.constant dense<2147483647> : vector<128xi32>
    %11 = vector.multi_reduction <minsi>, %10, %cst_4 [0] : vector<8x128xi32> to vector<128xi32>
    %12 = vector.shape_cast %11 : vector<128xi32> to vector<1x128xi32>
    %13 = vector.broadcast %12 : vector<1x128xi32> to vector<8x128xi32>
    %14 = arith.cmpi eq, %4, %13 : vector<8x128xi32>
    %cst_5 = arith.constant 0xFF800000 : f32
    %15 = vector.broadcast %cst_5 : f32 to vector<8x128xf32>
    %16 = arith.select %14, %15, %3 : vector<8x128xi1>, vector<8x128xf32>
    %cst_6 = arith.constant dense<0xFF800000> : vector<128xf32>
    %17 = vector.multi_reduction <maximumf>, %16, %cst_6 [0] : vector<8x128xf32> to vector<128xf32>
    %18 = vector.shape_cast %17 : vector<128xf32> to vector<1x128xf32>
    %19 = vector.broadcast %18 : vector<1x128xf32> to vector<8x128xf32>
    %20 = arith.cmpf oeq, %16, %19 : vector<8x128xf32>
    %c8_i32_7 = arith.constant 8 : i32
    %21 = vector.broadcast %c8_i32_7 : i32 to vector<8x128xi32>
    %22 = arith.select %20, %4, %21 : vector<8x128xi1>, vector<8x128xi32>
    %cst_8 = arith.constant dense<2147483647> : vector<128xi32>
    %23 = vector.multi_reduction <minsi>, %22, %cst_8 [0] : vector<8x128xi32> to vector<128xi32>
    %24 = vector.shape_cast %23 : vector<128xi32> to vector<1x128xi32>
    %25 = tpu.concatenate %6, %18 in 0 : vector<1x128xf32>, vector<1x128xf32> -> vector<2x128xf32>
    %c0_9 = arith.constant 0 : index
    %c0_10 = arith.constant 0 : index
    %26 = vector.load %arg3[%c0_9, %c0_10] : memref<2x128xf32, #tpu.memory_space<vmem>>, vector<2x128xf32>
    tpu.vector_store %arg3[%c0_9, %c0_10], %25 {strides = array<i32>} : memref<2x128xf32, #tpu.memory_space<vmem>>, vector<2x128xf32>,
    %27 = tpu.concatenate %12, %24 in 0 : vector<1x128xi32>, vector<1x128xi32> -> vector<2x128xi32>
    %c0_11 = arith.constant 0 : index
    %c0_12 = arith.constant 0 : index
    %28 = vector.load %arg4[%c0_11, %c0_12] : memref<2x128xi32, #tpu.memory_space<vmem>>, vector<2x128xi32>
    tpu.vector_store %arg4[%c0_11, %c0_12], %27 {strides = array<i32>} : memref<2x128xi32, #tpu.memory_space<vmem>>, vector<2x128xi32>,
    return
  }
  func.func @transform_0(%arg0: i32) -> (i32, i32) {
    %c0_i32 = arith.constant 0 : i32
    %c0_i32_0 = arith.constant 0 : i32
    return %arg0, %c0_i32 : i32, i32
  }
  func.func @transform_1(%arg0: i32) -> (i32, i32) {
    %c0_i32 = arith.constant 0 : i32
    %c0_i32_0 = arith.constant 0 : i32
    %c0_i32_1 = arith.constant 0 : i32
    return %c0_i32, %c0_i32_0 : i32, i32
  }
  func.func @transform_2(%arg0: i32) -> (i32, i32) {
    %c0_i32 = arith.constant 0 : i32
    %c0_i32_0 = arith.constant 0 : i32
    return %c0_i32, %arg0 : i32, i32
  }
  func.func @transform_3(%arg0: i32) -> (i32, i32) {
    %c0_i32 = arith.constant 0 : i32
    %c0_i32_0 = arith.constant 0 : i32
    return %c0_i32, %arg0 : i32, i32
  }
}

</mosaic_0001>

<llo_original>
// kernel: top_n_router.1
$region0: #{top_n_router.1}
  #allocation0 [shape = 'u32[]', space=smem, size = 0x4, offset = 0x4, fixed_abs, tag = 'smem constant byte address 0x4 - core index']
  #allocation1 [shape = 'u32[144,128]{1,0:T(1,128)}', space=vmem, size = 0x12000, scoped, tag = 'internal scratch']
  %s0 = inlined_call_operand.vmem [shape: f32[16,32], index: 0, kind: input, shape index: {}]
  %s1 = inlined_call_operand.vmem [shape: f32[32,8], index: 1, kind: input, shape index: {}]
  %s2 = inlined_call_operand.vmem [shape: f32[2,16], index: 2, kind: output, shape index: {0}]
  %s3 = inlined_call_operand.vmem [shape: s32[2,16], index: 3, kind: output, shape index: {1}]
  %4 = xla_tuple %s2, %s3
  %s5 = sld [smem:[#allocation0]]
  $region26: #{top_n_router.1} parent=0
    _
  %s7 = ssub.s32 1, %s5
  %s8 = scalar_select 0, %s7, %s5
  // Predicated region
  $region2: #{top_n_router.1} parent=0 // pred_check
    _
  $region3: #{top_n_router.1} parent=0 // pred_check_branch
    %10 = sbr.rel (0) target = $region5
  $region4: #{top_n_router.1} parent=0 // pred_region
    _
  $region5: #{top_n_router.1} parent=0 // pred_fallthru
    _
  // Predicated region
  $region6: #{top_n_router.1} parent=0 // pred_check
    _
  $region7: #{top_n_router.1} parent=0 // pred_check_branch
    %12 = sbr.rel (0) target = $region9
  $region8: #{top_n_router.1} parent=0 // pred_region
    _
  $region9: #{top_n_router.1} parent=0 // pred_fallthru
    _
  %v13 = vld [vmem:[%s0] sm:$0xff]
  %v14 = vld [vmem:[%s0 + $0x8] sm:$0xff]
  %v15 = vld [vmem:[%s0 + $0x10] sm:$0xff]
  %v16 = vld [vmem:[%s0 + $0x18] sm:$0xff]
  %v17 = vld [vmem:[%s0 + $0x20] sm:$0xff]
  %v18 = vld [vmem:[%s0 + $0x28] sm:$0xff]
  %v19 = vld [vmem:[%s0 + $0x30] sm:$0xff]
  %v20 = vld [vmem:[%s0 + $0x38] sm:$0xff]
  %v21 = vld [vmem:[%s0 + $0x40] sm:$0xff]
  %v22 = vld [vmem:[%s0 + $0x48] sm:$0xff]
  %v23 = vld [vmem:[%s0 + $0x50] sm:$0xff]
  %v24 = vld [vmem:[%s0 + $0x58] sm:$0xff]
  %v25 = vld [vmem:[%s0 + $0x60] sm:$0xff]
  %v26 = vld [vmem:[%s0 + $0x68] sm:$0xff]
  %v27 = vld [vmem:[%s0 + $0x70] sm:$0xff]
  %v28 = vld [vmem:[%s0 + $0x78] sm:$0xff]
  %v29 = vld [vmem:[%s1] sm:$0xff]
  %v30 = vld [vmem:[%s1 + $0x8] sm:$0xff]
  %v31 = vld [vmem:[%s1 + $0x10] sm:$0xff]
  %v32 = vld [vmem:[%s1 + $0x18] sm:$0xff]
  %vm33 = vcmask 261120
  %v35 = vsel %vm33, %v13, 0
  %v38 = vsel %vm33, %v14, 0
  %v41 = vsel %vm33, %v15, 0
  %v44 = vsel %vm33, %v16, 0
  %v47 = vsel %vm33, %v17, 0
  %v50 = vsel %vm33, %v18, 0
  %v53 = vsel %vm33, %v19, 0
  %v56 = vsel %vm33, %v20, 0
  %v59 = vsel %vm33, %v21, 0
  %v62 = vsel %vm33, %v22, 0
  %v65 = vsel %vm33, %v23, 0
  %v68 = vsel %vm33, %v24, 0
  %v71 = vsel %vm33, %v25, 0
  %v74 = vsel %vm33, %v26, 0
  %v77 = vsel %vm33, %v27, 0
  %v80 = vsel %vm33, %v28, 0
  %82 = vmatprep.subr.mxu0 0.0
  %83 = vmatpush1.msra.mxu0 0.0
  %84 = vmatprep.subr.mxu0 0.0
  %85 = vmatpush1.msra.mxu0 0.0
  %86 = vmatprep.subr.mxu0 0.0
  %87 = vmatpush1.msra.mxu0 0.0
  %88 = vmatprep.subr.mxu0 0.0
  %89 = vmatpush1.msra.mxu0 0.0
  %90 = vmatprep.subr.mxu0 0.0
  %91 = vmatpush1.msra.mxu0 0.0
  %92 = vmatprep.subr.mxu0 0.0
  %93 = vmatpush1.msra.mxu0 0.0
  %94 = vmatprep.subr.mxu0 0.0
  %95 = vmatpush1.msra.mxu0 0.0
  %96 = vmatprep.subr.mxu0 0.0
  %97 = vmatpush1.msra.mxu0 0.0
  %98 = vmatprep.subr.mxu0 0.0
  %99 = vmatpush1.msra.mxu0 0.0
  %100 = vmatprep.subr.mxu0 0.0
  %101 = vmatpush1.msra.mxu0 0.0
  %102 = vmatprep.subr.mxu0 0.0
  %103 = vmatpush1.msra.mxu0 0.0
  %104 = vmatprep.subr.mxu0 0.0
  %105 = vmatpush1.msra.mxu0 0.0
  %106 = vmatprep.subr.mxu0 0.0
  %107 = vmatpush1.msra.mxu0 %v32
  %108 = vmatprep.subr.mxu0 0.0
  %109 = vmatpush1.msra.mxu0 %v31
  %110 = vmatprep.subr.mxu0 0.0
  %111 = vmatpush1.msra.mxu0 %v30
  %112 = vmatprep.subr.mxu0 0.0
  %113 = vmatpush1.msra.mxu0 %v29
  %114 = vmatprep.subr.mxu0 0.0
  %115 = vmatpush2.msra.mxu0 0.0
  %116 = vmatprep.subr.mxu0 0.0
  %117 = vmatpush2.msra.mxu0 0.0
  %118 = vmatprep.subr.mxu0 0.0
  %119 = vmatpush2.msra.mxu0 0.0
  %120 = vmatprep.subr.mxu0 0.0
  %121 = vmatpush2.msra.mxu0 0.0
  %122 = vmatprep.subr.mxu0 0.0
  %123 = vmatpush2.msra.mxu0 0.0
  %124 = vmatprep.subr.mxu0 0.0
  %125 = vmatpush2.msra.mxu0 0.0
  %126 = vmatprep.subr.mxu0 0.0
  %127 = vmatpush2.msra.mxu0 0.0
  %128 = vmatprep.subr.mxu0 0.0
  %129 = vmatpush2.msra.mxu0 0.0
  %130 = vmatprep.subr.mxu0 0.0
  %131 = vmatpush2.msra.mxu0 0.0
  %132 = vmatprep.subr.mxu0 0.0
  %133 = vmatpush2.msra.mxu0 0.0
  %134 = vmatprep.subr.mxu0 0.0
  %135 = vmatpush2.msra.mxu0 0.0
  %136 = vmatprep.subr.mxu0 0.0
  %137 = vmatpush2.msra.mxu0 0.0
  %138 = vmatprep.subr.mxu0 0.0
  %139 = vmatpush2.msra.mxu0 0.0
  %140 = vmatprep.subr.mxu0 0.0
  %141 = vmatpush2.msra.mxu0 0.0
  %142 = vmatprep.subr.mxu0 0.0
  %143 = vmatpush2.msra.mxu0 0.0
  %144 = vmatprep.subr.mxu0 0.0
  %145 = vmatpush2.msra.mxu0 0.0
  %146 = vmatprep.mubr.f32.mxu0 0.0
  %147 = vmatmul.mubr.f32.gmra.mxu0 %v35
  %v148 = vpop.f32.mrf.mxu0
  %v149 = vadd.f32 0.0, %v148
  %v150 = vpop.f32.mrf.mxu0
  %151 = vmatprep.mubr.f32.mxu0 0.0
  %152 = vmatmul.mubr.f32.gmra.mxu0 %v38
  %v153 = vpop.f32.mrf.mxu0
  %v154 = vadd.f32 0.0, %v153
  %v155 = vpop.f32.mrf.mxu0
  %156 = vmatprep.mubr.f32.mxu0 0.0
  %157 = vmatmul.mubr.f32.gmra.mxu0 %v41
  %v158 = vpop.f32.mrf.mxu0
  %v159 = vadd.f32 0.0, %v158
  %v160 = vpop.f32.mrf.mxu0
  %161 = vmatprep.mubr.f32.mxu0 0.0
  %162 = vmatmul.mubr.f32.gmra.mxu0 %v44
  %v163 = vpop.f32.mrf.mxu0
  %v164 = vadd.f32 0.0, %v163
  %v165 = vpop.f32.mrf.mxu0
  %166 = vmatprep.mubr.f32.mxu0 0.0
  %167 = vmatmul.mubr.f32.gmra.mxu0 %v47
  %v168 = vpop.f32.mrf.mxu0
  %v169 = vadd.f32 0.0, %v168
  %v170 = vpop.f32.mrf.mxu0
  %171 = vmatprep.mubr.f32.mxu0 0.0
  %172 = vmatmul.mubr.f32.gmra.mxu0 %v50
  %v173 = vpop.f32.mrf.mxu0
  %v174 = vadd.f32 0.0, %v173
  %v175 = vpop.f32.mrf.mxu0
  %176 = vmatprep.mubr.f32.mxu0 0.0
  %177 = vmatmul.mubr.f32.gmra.mxu0 %v53
  %v178 = vpop.f32.mrf.mxu0
  %v179 = vadd.f32 0.0, %v178
  %v180 = vpop.f32.mrf.mxu0
  %181 = vmatprep.mubr.f32.mxu0 0.0
  %182 = vmatmul.mubr.f32.gmra.mxu0 %v56
  %v183 = vpop.f32.mrf.mxu0
  %v184 = vadd.f32 0.0, %v183
  %v185 = vpop.f32.mrf.mxu0
  %186 = vmatprep.mubr.f32.mxu0 0.0
  %187 = vmatmul.mubr.f32.gmra.mxu0 %v59
  %v188 = vpop.f32.mrf.mxu0
  %v189 = vadd.f32 0.0, %v188
  %v190 = vpop.f32.mrf.mxu0
  %191 = vmatprep.mubr.f32.mxu0 0.0
  %192 = vmatmul.mubr.f32.gmra.mxu0 %v62
  %v193 = vpop.f32.mrf.mxu0
  %v194 = vadd.f32 0.0, %v193
  %v195 = vpop.f32.mrf.mxu0
  %196 = vmatprep.mubr.f32.mxu0 0.0
  %197 = vmatmul.mubr.f32.gmra.mxu0 %v65
  %v198 = vpop.f32.mrf.mxu0
  %v199 = vadd.f32 0.0, %v198
  %v200 = vpop.f32.mrf.mxu0
  %201 = vmatprep.mubr.f32.mxu0 0.0
  %202 = vmatmul.mubr.f32.gmra.mxu0 %v68
  %v203 = vpop.f32.mrf.mxu0
  %v204 = vadd.f32 0.0, %v203
  %v205 = vpop.f32.mrf.mxu0
  %206 = vmatprep.mubr.f32.mxu0 0.0
  %207 = vmatmul.mubr.f32.gmra.mxu0 %v71
  %v208 = vpop.f32.mrf.mxu0
  %v209 = vadd.f32 0.0, %v208
  %v210 = vpop.f32.mrf.mxu0
  %211 = vmatprep.mubr.f32.mxu0 0.0
  %212 = vmatmul.mubr.f32.gmra.mxu0 %v74
  %v213 = vpop.f32.mrf.mxu0
  %v214 = vadd.f32 0.0, %v213
  %v215 = vpop.f32.mrf.mxu0
  %216 = vmatprep.mubr.f32.mxu0 0.0
  %217 = vmatmul.mubr.f32.gmra.mxu0 %v77
  %v218 = vpop.f32.mrf.mxu0
  %v219 = vadd.f32 0.0, %v218
  %v220 = vpop.f32.mrf.mxu0
  %221 = vmatprep.mubr.f32.mxu0 0.0
  %222 = vmatmul.mubr.f32.gmra.mxu0 %v80
  %v223 = vpop.f32.mrf.mxu0
  %v224 = vadd.f32 0.0, %v223
  %v225 = vpop.f32.mrf.mxu0
  %226 = vdwg.mxu0
  %227 = vxpose.xlu0.b32.start [1/16] %v149, 128
  %228 = vxpose.xlu0.b32.cont [2/16] %v154, 128
  %229 = vxpose.xlu0.b32.cont [3/16] %v159, 128
  %230 = vxpose.xlu0.b32.cont [4/16] %v164, 128
  %231 = vxpose.xlu0.b32.cont [5/16] %v169, 128
  %232 = vxpose.xlu0.b32.cont [6/16] %v174, 128
  %233 = vxpose.xlu0.b32.cont [7/16] %v179, 128
  %234 = vxpose.xlu0.b32.cont [8/16] %v184, 128
  %235 = vxpose.xlu0.b32.cont [9/16] %v189, 128
  %236 = vxpose.xlu0.b32.cont [10/16] %v194, 128
  %237 = vxpose.xlu0.b32.cont [11/16] %v199, 128
  %238 = vxpose.xlu0.b32.cont [12/16] %v204, 128
  %239 = vxpose.xlu0.b32.cont [13/16] %v209, 128
  %240 = vxpose.xlu0.b32.cont [14/16] %v214, 128
  %241 = vxpose.xlu0.b32.cont [15/16] %v219, 128
  %242 = vxpose.xlu0.b32.end [16/16] %v224, 128
  %v243 = vpop.trf.xlu0
  %v244 = vpop.trf.xlu0
  %v245 = vpop.trf.xlu0
  %v246 = vpop.trf.xlu0
  %v247 = vpop.trf.xlu0
  %v248 = vpop.trf.xlu0
  %v249 = vpop.trf.xlu0
  %v250 = vpop.trf.xlu0
  %v251 = vpop.trf.xlu0
  %v252 = vpop.trf.xlu0
  %v253 = vpop.trf.xlu0
  %v254 = vpop.trf.xlu0
  %v255 = vpop.trf.xlu0
  %v256 = vpop.trf.xlu0
  %v257 = vpop.trf.xlu0
  %v258 = vpop.trf.xlu0
  %v259 = vlaneseq
  %v260 = vshrl.u32 %v259, 7
  %v261 = vrot.slane %v243, 4
  %v262 = vmax.f32 %v243, %v261
  %v263 = vrot.slane %v262, 2
  %v264 = vmax.f32 %v262, %v263
  %v265 = vrot.slane %v264, 1
  %v266 = vmax.f32 %v264, %v265
  %vm267 = vcmp.eq.f32.partialorder %v243, %v266
  %v268 = vsel %vm267, %v260, 8
  %v269 = vrot.slane %v268, 4
  %vm270 = vcmp.lt.s32.totalorder %v268, %v269
  %v271 = vsel %vm270, %v268, %v269
  %v272 = vrot.slane %v271, 2
  %vm273 = vcmp.lt.s32.totalorder %v271, %v272
  %v274 = vsel %vm273, %v271, %v272
  %v275 = vrot.slane %v274, 1
  %vm276 = vcmp.lt.s32.totalorder %v274, %v275
  %v277 = vsel %vm276, %v274, %v275
  %vm278 = vcmp.eq.s32.totalorder %v260, %v277
  %v279 = vsel %vm278, -inf, %v243
  %v280 = vrot.slane %v279, 4
  %v281 = vmax.f32 %v279, %v280
  %v282 = vrot.slane %v281, 2
  %v283 = vmax.f32 %v281, %v282
  %v284 = vrot.slane %v283, 1
  %v285 = vmax.f32 %v283, %v284
  %vm286 = vcmp.eq.f32.partialorder %v279, %v285
  %v287 = vsel %vm286, %v260, 8
  %v288 = vrot.slane %v287, 4
  %vm289 = vcmp.lt.s32.totalorder %v287, %v288
  %v290 = vsel %vm289, %v287, %v288
  %v291 = vrot.slane %v290, 2
  %vm292 = vcmp.lt.s32.totalorder %v290, %v291
  %v293 = vsel %vm292, %v290, %v291
  %v294 = vrot.slane %v293, 1
  %vm295 = vcmp.lt.s32.totalorder %v293, %v294
  %v296 = vsel %vm295, %v293, %v294
  %vm297 = vcmask 1040384
  %v298 = vsel %vm297, %v266, %v285
  %299 = vst [vmem:[%s2] sm:$0x3] %v298
  %v300 = vsel %vm297, %v277, %v296
  %301 = vst [vmem:[%s3] sm:$0x3] %v300
  // Predicated region
  $region10: #{top_n_router.1} parent=0 // pred_check
    _
  $region11: #{top_n_router.1} parent=0 // pred_check_branch
    %303 = sbr.rel (0) target = $region13
  $region12: #{top_n_router.1} parent=0 // pred_region
    _
  $region13: #{top_n_router.1} parent=0 // pred_fallthru
    _
  // Predicated region
  $region14: #{top_n_router.1} parent=0 // pred_check
    _
  $region15: #{top_n_router.1} parent=0 // pred_check_branch
    %305 = sbr.rel (0) target = $region17
  $region16: #{top_n_router.1} parent=0 // pred_region
    _
  $region17: #{top_n_router.1} parent=0 // pred_fallthru
    _
  // Predicated region
  $region18: #{top_n_router.1} parent=0 // pred_check
    _
  $region19: #{top_n_router.1} parent=0 // pred_check_branch
    %307 = sbr.rel (0) target = $region21
  $region20: #{top_n_router.1} parent=0 // pred_region
    _
  $region21: #{top_n_router.1} parent=0 // pred_fallthru
    _
  // Predicated region
  $region22: #{top_n_router.1} parent=0 // pred_check
    _
  $region23: #{top_n_router.1} parent=0 // pred_check_branch
    %309 = sbr.rel (0) target = $region25
  $region24: #{top_n_router.1} parent=0 // pred_region
    _
  $region25: #{top_n_router.1} parent=0 // pred_fallthru
    _

</llo_original>
